<compile_context>
chip_gen: v7x
topology: tpu7x:2x2x1
jax: 0.10.0
libtpu: 0.0.40
codegen_flags: <defaults>
</compile_context>

<pallas_src>
import math
import numpy as np

import jax
import jax.numpy as jnp
from jax.experimental import pallas as pl
from jax.experimental.pallas import tpu as pltpu


# ----------------------------- configuration --------------------------------
OUT_CHANNELS = 4
IN_CHANNELS  = 4
KERNEL_SIZE  = (3, 3)
STRIDE       = (1, 1)
PADDING      = (1, 1)
DILATION     = (1, 1)
GROUPS       = 1

MODE      = 4          # t-basis core mode size (perfect square, permute_and_group_factors=True)
MODE_BASE = 2          # sqrt(MODE)
RANK      = 8          # tensor-ring rank
NUM_BASIS = 16         # size of the shared basis

WEIGHT_SHAPE = (OUT_CHANNELS, IN_CHANNELS) + KERNEL_SIZE   # (4, 4, 3, 3)


# --------------------------- z-order / padding plan --------------------------
# TODO(synk): compute_pad_to_powers_plan / compute_z_order / combine_z_order_plans
# are reconstructed for the case where paired dims (out/in channels, H/W) factorize
# into an equal number of MODE_BASE factors; unequal factor counts not implemented.
def build_plan(weight_shape, base):
    dims_padded, ks = [], []
    for d in weight_shape:
        k = 0
        while base ** k < d:
            k += 1
        dims_padded.append(base ** k)
        ks.append(k)
    assert len(weight_shape) % 2 == 0
    starts = np.cumsum([0] + ks).tolist()
    z_order = []
    for g in range(0, len(weight_shape), 2):
        ka, kb = ks[g], ks[g + 1]
        assert ka == kb, "TODO(synk): unequal base-factor counts not implemented"
        a_idx = list(range(starts[g], starts[g] + ka))
        b_idx = list(range(starts[g + 1], starts[g + 1] + kb))
        for t in range(ka):
            z_order.append(a_idx[t])
            z_order.append(b_idx[t])
    num_modes = len(z_order) // 2
    return dict(shape_src=tuple(weight_shape),
                shape_padded=tuple(dims_padded),
                z_order=z_order,
                num_modes=num_modes,
                base=base)


PLAN = build_plan(WEIGHT_SHAPE, MODE_BASE)
NUM_MODES = PLAN["num_modes"]        # == 4 for (4,4,3,3)


def inverse_plan(w_dst, plan):
    """reshape_inv_plan + pad_inv_plan: grouped z-order modes -> OIHW weight."""
    base, z = plan["base"], plan["z_order"]
    nf = len(z)
    w = w_dst.reshape((base,) * nf)                        # ungroup modes into base factors
    inv_perm = [z.index(t) for t in range(nf)]             # z-order -> natural factor order
    w = jnp.transpose(w, inv_perm)
    w = w.reshape(plan["shape_padded"])
    slices = tuple(slice(0, d) for d in plan["shape_src"])  # un-pad
    return w[slices]


# ----------------------------- weight decompression --------------------------
def tr_contract(cores):
    """Tensor-ring contraction: W[i1..iM] = Tr(G1[:,i1,:] ... GM[:,iM,:])."""
    # Tiny (rank=8, 256 outputs) -> plain JAX, fused by XLA inside the jit.
    res = cores[0]                                  # (r, m, r)
    for k in range(1, cores.shape[0]):
        res = jnp.einsum('a...b,bcd->a...cd', res, cores[k])
    return jnp.trace(res, axis1=0, axis2=res.ndim - 1)   # (mode,)*num_modes


def decompress_full(basis_weights, basis):
    num_basis, r, m, r2 = basis.shape
    # basis-weight combination: ~65 kFLOP -> cheaper as a fused XLA dot than a
    # dedicated pallas_call launch.
    cores_flat = jnp.dot(basis_weights, basis.reshape(num_basis, -1),
                         precision=jax.lax.Precision.HIGHEST)
    cores = cores_flat.reshape(NUM_MODES, r, m, r2)
    # rank_adaptation is identity-initialized (multiplies by 1) -> omitted
    w_dst = tr_contract(cores)
    # tensor_truncate_shape is a no-op here (all plan dst dims == MODE)
    return inverse_plan(w_dst, PLAN)


# -------------------------- fused implicit-GEMM conv --------------------------
def conv2d_pallas(x, weight, bias, stride, padding, dilation, groups):
    """y = conv2d(x, weight, bias) as a single Pallas kernel (implicit GEMM).

    Trick (stride handled by dense compute + subsample): with the padded input
    flattened per channel as x_f[c, n*Hp*Wp + h*Wp + w], the value needed by
    output position p = n*Hp*Wp + h*Wp + w for tap (i, j) is x_f[c, p + i*dh*Wp + j*dw]
    -- a constant lane offset.  So the kernel gathers KH*KW shifted windows of a
    resident x_f tile and accumulates small MXU dots; no im2col is materialized.
    """
    assert groups == 1  # TODO(synk): grouped convolution not implemented
    n, c_in, h, w = x.shape
    c_out, _, kh, kw = weight.shape
    sh, sw = stride
    ph, pw = padding
    dh, dw = dilation
    h_out = (h + 2 * ph - dh * (kh - 1) - 1) // sh + 1
    w_out = (w + 2 * pw - dw * (kw - 1) - 1) // sw + 1
    hp, wp = h + 2 * ph, w + 2 * pw

    # constant lane offset of each tap in the flattened padded image
    offs = [i * dh * wp + j * dw for i in range(kh) for j in range(kw)]
    HALO = 128
    # TODO(synk): multi-block halo for very large dilation*kernel not implemented
    assert max(offs) <= HALO

    c_out_pad = ((c_out + 7) // 8) * 8              # full 8-sublane output tiles
    n_taps = kh * kw
    k_taps = n_taps * c_in                          # GEMM contraction length
    k_cols = k_taps + 1                             # + bias column

    # dense output index space (unstrided grid), then round to lane tiles
    m_needed = (n - 1) * hp * wp + (h_out - 1) * sh * wp + (w_out - 1) * sw + 1
    grid_m = 2                                      # >= 2 steps: v7x 2-TC / megacore split
    tm = 128 * pl.cdiv(m_needed, grid_m * 128)
    while tm > 2048:                                # keep tiles VMEM-safe (v7x: 64 MiB)
        grid_m *= 2
        tm = 128 * pl.cdiv(m_needed, grid_m * 128)
    m_pad = grid_m * tm
    l_pad = m_pad + HALO
    halo_per_tile = tm // HALO

    # ---- wrapper-side layout glue (one cheap transpose of x, no 9x blow-up) ----
    x_p = jnp.pad(x, ((0, 0), (0, 0), (ph, ph), (pw, pw)))
    x_f = x_p.transpose(1, 0, 2, 3).reshape(c_in, n * hp * wp)
    x_f = jnp.pad(x_f, ((0, 0), (0, l_pad - n * hp * wp)))
    x_f = x_f.astype(jnp.bfloat16)                  # wrapper-side cast (v5e-friendly)

    # weight (o,c,i,j) -> (o, (i*kw+j)*c_in + c); append bias column; pad rows to 8
    w2 = weight.transpose(0, 2, 3, 1).reshape(c_out, k_taps)
    w2 = jnp.concatenate([w2, bias.reshape(c_out, 1)], axis=1)
    w2 = jnp.pad(w2, ((0, c_out_pad - c_out), (0, 0))).astype(jnp.bfloat16)

    def kernel(w_ref, xm_ref, xh_ref, o_ref):
        wmat = w_ref[...]                                            # (c_out_pad, k_cols) bf16
        xwin = jnp.concatenate([xm_ref[...], xh_ref[...]], axis=-1)  # (c_in, tm + HALO) bf16
        acc = jnp.zeros((c_out_pad, tm), jnp.float32)
        for t, off in enumerate(offs):                               # static 9-tap unroll
            wt = wmat[:, t * c_in:(t + 1) * c_in]                    # (c_out_pad, c_in)
            xs = xwin[:, off:off + tm]                               # shifted window (c_in, tm)
            acc = acc + jnp.dot(wt, xs, preferred_element_type=jnp.float32)
        # bias folded into the last weight column (broadcast across lanes)
        o_ref[...] = acc + wmat[:, k_taps:k_taps + 1].astype(jnp.float32)

    cost = pl.CostEstimate(
        flops=2 * c_out_pad * k_taps * m_pad,
        transcendentals=0,
        bytes_accessed=w2.size * 2 + x_f.size * 2 + c_out_pad * m_pad * 4)

    y2 = pl.pallas_call(
        kernel,
        out_shape=jax.ShapeDtypeStruct((c_out_pad, m_pad), jnp.float32),
        grid=(grid_m,),
        in_specs=[
            pl.BlockSpec((c_out_pad, k_cols), lambda mt: (0, 0)),          # weight+bias (resident)
            pl.BlockSpec((c_in, tm), lambda mt: (0, mt)),                  # main x tile
            pl.BlockSpec((c_in, HALO),                                     # 128-lane halo
                         lambda mt: (0, (mt + 1) * halo_per_tile)),
        ],
        out_specs=pl.BlockSpec((c_out_pad, tm), lambda mt: (0, mt)),
        compiler_params=pltpu.CompilerParams(
            dimension_semantics=("parallel",),
            vmem_limit_bytes=32 * 1024 * 1024),
        cost_estimate=cost,
    )(w2, x_f, x_f)

    # drop sublane padding, un-flatten the dense grid, subsample stride, drop pad cols
    y2 = y2[:c_out, :n * hp * wp].reshape(c_out, n, hp, wp)
    y2 = y2[:, :, ::sh, ::sw][:, :, :h_out, :w_out]
    return y2.transpose(1, 0, 2, 3)                 # (N, C_out, H_out, W_out)


@jax.jit
def tbasis_conv2d(x, basis_weights, basis, bias):
    weight = decompress_full(basis_weights, basis)
    return conv2d_pallas(x, weight, bias, STRIDE, PADDING, DILATION, GROUPS)


# ------------------------------------ main ------------------------------------
if __name__ == "__main__":
    key = jax.random.PRNGKey(0)
    kx, kb, kbias = jax.random.split(key, 3)

    x = jax.random.normal(kx, (2, IN_CHANNELS, 16, 16), dtype=jnp.float32)
    basis = jax.random.normal(kb, (NUM_BASIS, RANK, MODE, RANK), dtype=jnp.float32)
    bias = 0.1 * jax.random.normal(kbias, (OUT_CHANNELS,), dtype=jnp.float32)

    # basis_weights init: randn clamped to [-3, 3] (mirrors TBasisLayerBase.__init__)
    rng = np.random.RandomState(0)
    basis_weights = jnp.clip(
        jnp.asarray(rng.randn(NUM_MODES, NUM_BASIS), dtype=jnp.float32), -3.0, 3.0)

    # Kaiming std calibration of basis_weights (mirrors TBasisLayerBase.initialize)
    fan_in = IN_CHANNELS * KERNEL_SIZE[0] * KERNEL_SIZE[1]
    std_target = math.sqrt(2.0) / math.sqrt(fan_in)
    w0 = decompress_full(basis_weights, basis)
    std_before = float(jnp.std(w0, ddof=1))
    core_scaler = (std_target / std_before) ** (1.0 / NUM_MODES)
    basis_weights = basis_weights * core_scaler

    y = tbasis_conv2d(x, basis_weights, basis, bias)
    y = jax.block_until_ready(y)

    # quiet reference check against f32 XLA convolution (kernel uses bf16 operands)
    w_full = decompress_full(basis_weights, basis)
    y_ref = jax.lax.conv_general_dilated(
        x, w_full, window_strides=STRIDE,
        padding=[(PADDING[0], PADDING[0]), (PADDING[1], PADDING[1])],
        lhs_dilation=(1, 1), rhs_dilation=DILATION,
        dimension_numbers=("NCHW", "OIHW", "NCHW"),
        precision=jax.lax.Precision.HIGHEST,
    ) + bias.reshape(1, -1, 1, 1)
    np.testing.assert_allclose(np.asarray(y), np.asarray(y_ref),
                               rtol=2e-2, atol=5e-2)
    assert y.shape == (2, OUT_CHANNELS, 16, 16)

    print("KERNEL_OK")
</pallas_src>

<mosaic_0001>
module attributes {stable_mosaic.version = 11 : i64} {
  func.func @kernel(%arg0: i32, %arg1: memref<8x37xbf16, #tpu.memory_space<vmem>>, %arg2: memref<4x384xbf16, #tpu.memory_space<vmem>>, %arg3: memref<4x128xbf16, #tpu.memory_space<vmem>>, %arg4: memref<8x384xf32, #tpu.memory_space<vmem>>) attributes {dimension_semantics = [#tpu.dimension_semantics<parallel>], iteration_bounds = array<i64: 2>, scalar_prefetch = 0 : i64, scratch_operands = 0 : i64, tpu.core_type = #tpu.core_type<tc>, window_params = [{pipeline_mode = #tpu.pipeline_mode<synchronous>, transform_indices = @transform_0, window_bounds = array<i64: 8, 37>}, {transform_indices = @transform_1, window_bounds = array<i64: 4, 384>}, {transform_indices = @transform_2, window_bounds = array<i64: 4, 128>}, {transform_indices = @transform_3, window_bounds = array<i64: 8, 384>}]} {
    %c0 = arith.constant 0 : index
    %c0_0 = arith.constant 0 : index
    %0 = vector.load %arg1[%c0, %c0_0] : memref<8x37xbf16, #tpu.memory_space<vmem>>, vector<8x37xbf16>
    %c0_1 = arith.constant 0 : index
    %c0_2 = arith.constant 0 : index
    %1 = vector.load %arg2[%c0_1, %c0_2] : memref<4x384xbf16, #tpu.memory_space<vmem>>, vector<4x384xbf16>
    %c0_3 = arith.constant 0 : index
    %c0_4 = arith.constant 0 : index
    %2 = vector.load %arg3[%c0_3, %c0_4] : memref<4x128xbf16, #tpu.memory_space<vmem>>, vector<4x128xbf16>
    %3 = tpu.concatenate %1, %2 in 1 : vector<4x384xbf16>, vector<4x128xbf16> -> vector<4x512xbf16>
    %cst = arith.constant 0.000000e+00 : f32
    %4 = vector.broadcast %cst : f32 to vector<8x384xf32>
    %5 = vector.extract_strided_slice %0 {offsets = [0, 0], sizes = [8, 4], strides = [1, 1]} : vector<8x37xbf16> to vector<8x4xbf16>
    %6 = vector.extract_strided_slice %3 {offsets = [0, 0], sizes = [4, 384], strides = [1, 1]} : vector<4x512xbf16> to vector<4x384xbf16>
    %cst_5 = arith.constant dense<0.000000e+00> : vector<8x384xf32>
    %7 = tpu.matmul %5, %6, %cst_5 {dimension_numbers = #tpu.dot_dimension_numbers<[1], [0], [0], [1], [0, 0, 1, 1], [], []>} : vector<8x4xbf16>, vector<4x384xbf16>, vector<8x384xf32> -> vector<8x384xf32>
    %8 = arith.addf %4, %7 : vector<8x384xf32>
    %9 = vector.extract_strided_slice %0 {offsets = [0, 4], sizes = [8, 4], strides = [1, 1]} : vector<8x37xbf16> to vector<8x4xbf16>
    %10 = vector.extract_strided_slice %3 {offsets = [0, 1], sizes = [4, 384], strides = [1, 1]} : vector<4x512xbf16> to vector<4x384xbf16>
    %cst_6 = arith.constant dense<0.000000e+00> : vector<8x384xf32>
    %11 = tpu.matmul %9, %10, %cst_6 {dimension_numbers = #tpu.dot_dimension_numbers<[1], [0], [0], [1], [0, 0, 1, 1], [], []>} : vector<8x4xbf16>, vector<4x384xbf16>, vector<8x384xf32> -> vector<8x384xf32>
    %12 = arith.addf %8, %11 : vector<8x384xf32>
    %13 = vector.extract_strided_slice %0 {offsets = [0, 8], sizes = [8, 4], strides = [1, 1]} : vector<8x37xbf16> to vector<8x4xbf16>
    %14 = vector.extract_strided_slice %3 {offsets = [0, 2], sizes = [4, 384], strides = [1, 1]} : vector<4x512xbf16> to vector<4x384xbf16>
    %cst_7 = arith.constant dense<0.000000e+00> : vector<8x384xf32>
    %15 = tpu.matmul %13, %14, %cst_7 {dimension_numbers = #tpu.dot_dimension_numbers<[1], [0], [0], [1], [0, 0, 1, 1], [], []>} : vector<8x4xbf16>, vector<4x384xbf16>, vector<8x384xf32> -> vector<8x384xf32>
    %16 = arith.addf %12, %15 : vector<8x384xf32>
    %17 = vector.extract_strided_slice %0 {offsets = [0, 12], sizes = [8, 4], strides = [1, 1]} : vector<8x37xbf16> to vector<8x4xbf16>
    %18 = vector.extract_strided_slice %3 {offsets = [0, 18], sizes = [4, 384], strides = [1, 1]} : vector<4x512xbf16> to vector<4x384xbf16>
    %cst_8 = arith.constant dense<0.000000e+00> : vector<8x384xf32>
    %19 = tpu.matmul %17, %18, %cst_8 {dimension_numbers = #tpu.dot_dimension_numbers<[1], [0], [0], [1], [0, 0, 1, 1], [], []>} : vector<8x4xbf16>, vector<4x384xbf16>, vector<8x384xf32> -> vector<8x384xf32>
    %20 = arith.addf %16, %19 : vector<8x384xf32>
    %21 = vector.extract_strided_slice %0 {offsets = [0, 16], sizes = [8, 4], strides = [1, 1]} : vector<8x37xbf16> to vector<8x4xbf16>
    %22 = vector.extract_strided_slice %3 {offsets = [0, 19], sizes = [4, 384], strides = [1, 1]} : vector<4x512xbf16> to vector<4x384xbf16>
    %cst_9 = arith.constant dense<0.000000e+00> : vector<8x384xf32>
    %23 = tpu.matmul %21, %22, %cst_9 {dimension_numbers = #tpu.dot_dimension_numbers<[1], [0], [0], [1], [0, 0, 1, 1], [], []>} : vector<8x4xbf16>, vector<4x384xbf16>, vector<8x384xf32> -> vector<8x384xf32>
    %24 = arith.addf %20, %23 : vector<8x384xf32>
    %25 = vector.extract_strided_slice %0 {offsets = [0, 20], sizes = [8, 4], strides = [1, 1]} : vector<8x37xbf16> to vector<8x4xbf16>
    %26 = vector.extract_strided_slice %3 {offsets = [0, 20], sizes = [4, 384], strides = [1, 1]} : vector<4x512xbf16> to vector<4x384xbf16>
    %cst_10 = arith.constant dense<0.000000e+00> : vector<8x384xf32>
    %27 = tpu.matmul %25, %26, %cst_10 {dimension_numbers = #tpu.dot_dimension_numbers<[1], [0], [0], [1], [0, 0, 1, 1], [], []>} : vector<8x4xbf16>, vector<4x384xbf16>, vector<8x384xf32> -> vector<8x384xf32>
    %28 = arith.addf %24, %27 : vector<8x384xf32>
    %29 = vector.extract_strided_slice %0 {offsets = [0, 24], sizes = [8, 4], strides = [1, 1]} : vector<8x37xbf16> to vector<8x4xbf16>
    %30 = vector.extract_strided_slice %3 {offsets = [0, 36], sizes = [4, 384], strides = [1, 1]} : vector<4x512xbf16> to vector<4x384xbf16>
    %cst_11 = arith.constant dense<0.000000e+00> : vector<8x384xf32>
    %31 = tpu.matmul %29, %30, %cst_11 {dimension_numbers = #tpu.dot_dimension_numbers<[1], [0], [0], [1], [0, 0, 1, 1], [], []>} : vector<8x4xbf16>, vector<4x384xbf16>, vector<8x384xf32> -> vector<8x384xf32>
    %32 = arith.addf %28, %31 : vector<8x384xf32>
    %33 = vector.extract_strided_slice %0 {offsets = [0, 28], sizes = [8, 4], strides = [1, 1]} : vector<8x37xbf16> to vector<8x4xbf16>
    %34 = vector.extract_strided_slice %3 {offsets = [0, 37], sizes = [4, 384], strides = [1, 1]} : vector<4x512xbf16> to vector<4x384xbf16>
    %cst_12 = arith.constant dense<0.000000e+00> : vector<8x384xf32>
    %35 = tpu.matmul %33, %34, %cst_12 {dimension_numbers = #tpu.dot_dimension_numbers<[1], [0], [0], [1], [0, 0, 1, 1], [], []>} : vector<8x4xbf16>, vector<4x384xbf16>, vector<8x384xf32> -> vector<8x384xf32>
    %36 = arith.addf %32, %35 : vector<8x384xf32>
    %37 = vector.extract_strided_slice %0 {offsets = [0, 32], sizes = [8, 4], strides = [1, 1]} : vector<8x37xbf16> to vector<8x4xbf16>
    %38 = vector.extract_strided_slice %3 {offsets = [0, 38], sizes = [4, 384], strides = [1, 1]} : vector<4x512xbf16> to vector<4x384xbf16>
    %cst_13 = arith.constant dense<0.000000e+00> : vector<8x384xf32>
    %39 = tpu.matmul %37, %38, %cst_13 {dimension_numbers = #tpu.dot_dimension_numbers<[1], [0], [0], [1], [0, 0, 1, 1], [], []>} : vector<8x4xbf16>, vector<4x384xbf16>, vector<8x384xf32> -> vector<8x384xf32>
    %40 = arith.addf %36, %39 : vector<8x384xf32>
    %41 = vector.extract_strided_slice %0 {offsets = [0, 36], sizes = [8, 1], strides = [1, 1]} : vector<8x37xbf16> to vector<8x1xbf16>
    %42 = arith.extf %41 : vector<8x1xbf16> to vector<8x1xf32>
    %43 = vector.broadcast %42 : vector<8x1xf32> to vector<8x384xf32>
    %44 = arith.addf %40, %43 : vector<8x384xf32>
    %c0_14 = arith.constant 0 : index
    %c0_15 = arith.constant 0 : index
    %45 = vector.load %arg4[%c0_14, %c0_15] : memref<8x384xf32, #tpu.memory_space<vmem>>, vector<8x384xf32>
    tpu.vector_store %arg4[%c0_14, %c0_15], %44 {strides = array<i32>} : memref<8x384xf32, #tpu.memory_space<vmem>>, vector<8x384xf32>,
    return
  }
  func.func @transform_0(%arg0: i32) -> (i32, i32) {
    %c0_i32 = arith.constant 0 : i32
    %c0_i32_0 = arith.constant 0 : i32
    %c0_i32_1 = arith.constant 0 : i32
    return %c0_i32, %c0_i32_0 : i32, i32
  }
  func.func @transform_1(%arg0: i32) -> (i32, i32) {
    %c0_i32 = arith.constant 0 : i32
    %c0_i32_0 = arith.constant 0 : i32
    return %c0_i32, %arg0 : i32, i32
  }
  func.func @transform_2(%arg0: i32) -> (i32, i32) {
    %c1_i32 = arith.constant 1 : i32
    %0 = arith.addi %arg0, %c1_i32 : i32
    %c3_i32 = arith.constant 3 : i32
    %1 = arith.muli %0, %c3_i32 : i32
    %c0_i32 = arith.constant 0 : i32
    %c0_i32_0 = arith.constant 0 : i32
    return %c0_i32, %1 : i32, i32
  }
  func.func @transform_3(%arg0: i32) -> (i32, i32) {
    %c0_i32 = arith.constant 0 : i32
    %c0_i32_0 = arith.constant 0 : i32
    return %c0_i32, %arg0 : i32, i32
  }
}

</mosaic_0001>

<llo_original>
// kernel: tbasis_conv2d.1
$region0: #{tbasis_conv2d.1}
  #allocation0 [shape = 'u32[]', space=smem, size = 0x4, offset = 0x4, fixed_abs, tag = 'smem constant byte address 0x4 - core index']
  #allocation1 [shape = 'u32[144,128]{1,0:T(1,128)}', space=vmem, size = 0x12000, scoped, tag = 'internal scratch']
  %s0 = inlined_call_operand.vmem [shape: bf16[8,37], index: 0, kind: input, shape index: {}]
  %s1 = inlined_call_operand.vmem [shape: bf16[4,896], index: 1, kind: input, shape index: {}, may-alias: {1,2}]
  %s2 = inlined_call_operand.vmem [shape: bf16[4,896], index: 2, kind: input, shape index: {}, may-alias: {1,2}]
  %s3 = inlined_call_operand.vmem [shape: f32[8,768], index: 3, kind: output, shape index: {}]
  %s4 = sld [smem:[#allocation0]]
  $region45: #{tbasis_conv2d.1} parent=0
    _
  %s6 = ssub.s32 1, %s4
  %s7 = scalar_select 0, %s6, %s4
  loop: start=0, step=1, limit=4
  $region2: #{tbasis_conv2d.1} parent=0 // loop_pre_header
    _
  $region3: #{tbasis_conv2d.1} parent=0 // loop_header
    %s9 = sphi 0, %s13
    %p10 = scmp.ge.s32.totalorder %s9, 4
    %s17 = sphi 0, %s17
    %s19 = sphi 0, %s17
    %s20 = sphi 0, %s19
    %s34 = sphi 0, %s20
    %s40 = sphi 0, %s42
    %s43 = sphi 0, %s40
    %s44 = sphi 0, %s43
    %s60 = sphi 0, %s44
    %s70 = sphi 0, %s72
    %s73 = sphi 0, %s70
    %s74 = sphi 0, %s73
    %s90 = sphi 0, %s74
    %s96 = sphi 0, %s98
    %s99 = sphi 0, %s96
    %s100 = sphi 0, %s99
    %s116 = sphi 0, %s100
  $region4: #{tbasis_conv2d.1} parent=0 // loop_header_branch
    %12 = sbr.rel (%p10) target = $region8
  $region5: #{tbasis_conv2d.1} parent=0 // loop_body
    %s14 = ssub.s32 %s9, 1
    %s15 = ssub.s32 %s9, 2
    %s16 = sadd.s32 %s9, 1
    %s18 = sadd.s32 %s17, 1
    %p21 = scmp.eq.s32.totalorder %s9, 1
    %p22 = scmp.ne.s32.totalorder %s17, %s19
    %p23 = scmp.eq.s32.totalorder %s9, 0
    %p24 = por %p22, %p23
    %p25 = scmp.ne.s32.totalorder %s17, %s19
    %p26 = scmp.eq.s32.totalorder %s14, 1
    %p27 = por %p25, %p26
    %p28 = scmp.ne.s32.totalorder %s19, %s20
    %p29 = scmp.eq.s32.totalorder %s14, 0
    %p30 = por %p28, %p29
    %p31 = scmp.ne.s32.totalorder %s19, %s20
    %p32 = scmp.eq.s32.totalorder %s15, 1
    %p33 = por %p31, %p32
    %p35 = scmp.ne.s32.totalorder %s20, %s34
    %p36 = scmp.eq.s32.totalorder %s15, 0
    %p37 = por %p35, %p36
    %s38 = ssub.s32 %s9, %s16
    %p39 = scmp.eq.s32.totalorder %s38, 0
    %s41 = sadd.s32 %s40, 1
    %s42 = scalar_select %p39, %s40, %s41
    %p45 = pneg %p39
    %p46 = scmp.eq.s32.totalorder %s9, 1
    %p47 = por %p45, %p46
    %p48 = scmp.ne.s32.totalorder %s40, %s43
    %p49 = scmp.eq.s32.totalorder %s9, 0
    %p50 = por %p48, %p49
    %p51 = scmp.ne.s32.totalorder %s40, %s43
    %p52 = scmp.eq.s32.totalorder %s14, 1
    %p53 = por %p51, %p52
    %p54 = scmp.ne.s32.totalorder %s43, %s44
    %p55 = scmp.eq.s32.totalorder %s14, 0
    %p56 = por %p54, %p55
    %p57 = scmp.ne.s32.totalorder %s43, %s44
    %p58 = scmp.eq.s32.totalorder %s15, 1
    %p59 = por %p57, %p58
    %p61 = scmp.ne.s32.totalorder %s44, %s60
    %p62 = scmp.eq.s32.totalorder %s15, 0
    %p63 = por %p61, %p62
    %s64 = sadd.s32 %s9, 1
    %s65 = smul.u32 %s64, 3
    %s66 = sadd.s32 %s16, 1
    %s67 = smul.u32 %s66, 3
    %s68 = ssub.s32 %s65, %s67
    %p69 = scmp.eq.s32.totalorder %s68, 0
    %s71 = sadd.s32 %s70, 1
    %s72 = scalar_select %p69, %s70, %s71
    %p75 = pneg %p69
    %p76 = scmp.eq.s32.totalorder %s9, 1
    %p77 = por %p75, %p76
    %p78 = scmp.ne.s32.totalorder %s70, %s73
    %p79 = scmp.eq.s32.totalorder %s9, 0
    %p80 = por %p78, %p79
    %p81 = scmp.ne.s32.totalorder %s70, %s73
    %p82 = scmp.eq.s32.totalorder %s14, 1
    %p83 = por %p81, %p82
    %p84 = scmp.ne.s32.totalorder %s73, %s74
    %p85 = scmp.eq.s32.totalorder %s14, 0
    %p86 = por %p84, %p85
    %p87 = scmp.ne.s32.totalorder %s73, %s74
    %p88 = scmp.eq.s32.totalorder %s15, 1
    %p89 = por %p87, %p88
    %p91 = scmp.ne.s32.totalorder %s74, %s90
    %p92 = scmp.eq.s32.totalorder %s15, 0
    %p93 = por %p91, %p92
    %s94 = ssub.s32 %s9, %s16
    %p95 = scmp.eq.s32.totalorder %s94, 0
    %s97 = sadd.s32 %s96, 1
    %s98 = scalar_select %p95, %s96, %s97
    %p101 = pneg %p95
    %p102 = scmp.eq.s32.totalorder %s9, 1
    %p103 = por %p101, %p102
    %p104 = scmp.ne.s32.totalorder %s96, %s99
    %p105 = scmp.eq.s32.totalorder %s9, 0
    %p106 = por %p104, %p105
    %p107 = scmp.ne.s32.totalorder %s96, %s99
    %p108 = scmp.eq.s32.totalorder %s14, 1
    %p109 = por %p107, %p108
    %p110 = scmp.ne.s32.totalorder %s99, %s100
    %p111 = scmp.eq.s32.totalorder %s14, 0
    %p112 = por %p110, %p111
    %p113 = scmp.ne.s32.totalorder %s99, %s100
    %p114 = scmp.eq.s32.totalorder %s15, 1
    %p115 = por %p113, %p114
    %p117 = scmp.ne.s32.totalorder %s100, %s116
    %p118 = scmp.eq.s32.totalorder %s15, 0
    %p119 = por %p117, %p118
    %p120 = scmp.le.s32.totalorder 1, %s9
    %p121 = scmp.lt.s32.totalorder %s9, 3
    %p122 = pnand %p120, %p121
    %p123 = pneg %p122
    // Predicated region
    $region9: #{tbasis_conv2d.1} parent=5 // pred_check
      _
    $region10: #{tbasis_conv2d.1} parent=5 // pred_check_branch
      %125 = sbr.rel (%p122) target = $region12
    $region11: #{tbasis_conv2d.1} parent=5 // pred_region
      %s126 = ssub.s32 %s9, 1
      // Predicated region
      $region13: #{tbasis_conv2d.1} parent=11 // pred_check
        %p127 = pneg %p30
      $region14: #{tbasis_conv2d.1} parent=11 // pred_check_branch
        %129 = sbr.rel (%p127) target = $region16
      $region15: #{tbasis_conv2d.1} parent=11 // pred_region
        _
      $region16: #{tbasis_conv2d.1} parent=11 // pred_fallthru
        _
    $region12: #{tbasis_conv2d.1} parent=5 // pred_fallthru
      _
    %p130 = scmp.lt.s32.totalorder %s9, 2
    // Predicated region
    $region17: #{tbasis_conv2d.1} parent=5 // pred_check
      %p131 = pneg %p130
    $region18: #{tbasis_conv2d.1} parent=5 // pred_check_branch
      %133 = sbr.rel (%p131) target = $region20
    $region19: #{tbasis_conv2d.1} parent=5 // pred_region
      // Predicated region
      $region21: #{tbasis_conv2d.1} parent=19 // pred_check
        %p134 = pneg %p50
      $region22: #{tbasis_conv2d.1} parent=19 // pred_check_branch
        %136 = sbr.rel (%p134) target = $region24
      $region23: #{tbasis_conv2d.1} parent=19 // pred_region
        %s137 = smul.u32 3, %s9
        %s138 = ssub.s32 7, %s137
        %p139 = scmp.lt.s32.totalorder %s138, 3
        %s140 = scalar_select %p139, %s138, 3
        %s141 = smul.u32 32, %s140
        %p142 = scmp.lt.s32.totalorder %s137, 6
        %s143 = scalar_select %p142, %s137, 6
        %s144 = smul.addr %s143, 2
        %s145 = scalar_lea.vmem %s1, %s144
        %s146 = smul.u32 3, %s9
        %s147 = ssub.s32 7, %s146
        %p148 = scmp.lt.s32.totalorder %s147, 3
        %s149 = scalar_select %p148, %s147, 3
        %s150 = smul.u32 32, %s149
      $region24: #{tbasis_conv2d.1} parent=19 // pred_fallthru
        _
      // Predicated region
      $region25: #{tbasis_conv2d.1} parent=19 // pred_check
        %p151 = pneg %p80
      $region26: #{tbasis_conv2d.1} parent=19 // pred_check_branch
        %153 = sbr.rel (%p151) target = $region28
      $region27: #{tbasis_conv2d.1} parent=19 // pred_region
        %s154 = sadd.s32 %s9, 1
        %s155 = smul.u32 %s154, 3
        %p156 = scmp.lt.s32.totalorder %s155, 6
        %s157 = scalar_select %p156, %s155, 6
        %s158 = smul.addr %s157, 2
        %s159 = scalar_lea.vmem %s2, %s158
        %s160 = sadd.s32 %s9, 1
        %s161 = smul.u32 %s160, 3
      $region28: #{tbasis_conv2d.1} parent=19 // pred_fallthru
        _
    $region20: #{tbasis_conv2d.1} parent=5 // pred_fallthru
      _
    %p162 = scmp.le.s32.totalorder 1, %s9
    %p163 = scmp.lt.s32.totalorder %s9, 3
    %p164 = pnand %p162, %p163
    %p165 = pneg %p164
    // Predicated region
    $region29: #{tbasis_conv2d.1} parent=5 // pred_check
      _
    $region30: #{tbasis_conv2d.1} parent=5 // pred_check_branch
      %167 = sbr.rel (%p164) target = $region32
    $region31: #{tbasis_conv2d.1} parent=5 // pred_region
      %s168 = ssub.s32 %s9, 1
      %p169 = pneg %p30
      %p170 = pneg %p27
      %s171 = smul.u32 3, %s14
      %s172 = ssub.s32 7, %s171
      %p173 = scmp.lt.s32.totalorder %s172, 3
      %s174 = scalar_select %p173, %s172, 3
      %s175 = smul.u32 32, %s174
      %p176 = scmp.lt.s32.totalorder %s171, 6
      %s177 = scalar_select %p176, %s171, 6
      %s178 = smul.addr %s177, 2
      %s179 = scalar_lea.vmem %s1, %s178
      %p180 = pneg %p56
      %p181 = pneg %p53
      %s182 = sadd.s32 %s14, 1
      %s183 = smul.u32 %s182, 3
      %p184 = scmp.lt.s32.totalorder %s183, 6
      %s185 = scalar_select %p184, %s183, 6
      %s186 = smul.addr %s185, 2
      %s187 = scalar_lea.vmem %s2, %s186
      %p188 = pneg %p86
      %p189 = pneg %p83
      %p190 = pneg %p112
      %p191 = pneg %p109
      %s192 = smul.u32 3, %s14
      %p193 = scmp.lt.s32.totalorder %s192, 5
      %s194 = scalar_select %p193, %s192, 5
      %s195 = smul.addr %s194, 8
      %s196 = scalar_lea.vmem %s3, %s195
      %s197 = smul.u32 3, %s14
      %s198 = ssub.s32 7, %s197
      %p199 = scmp.lt.s32.totalorder %s198, 3
      %s200 = scalar_select %p199, %s198, 3
      %s201 = smul.u32 32, %s200
      %p202 = scmp.lt.s32.totalorder %s197, 6
      %s203 = scalar_select %p202, %s197, 6
      %s204 = smul.addr %s203, 2
      %s205 = scalar_lea.vmem %s1, %s204
      %s206 = smul.u32 3, %s14
      %s207 = ssub.s32 7, %s206
      %p208 = scmp.lt.s32.totalorder %s207, 3
      %s209 = scalar_select %p208, %s207, 3
      %s210 = smul.u32 32, %s209
      %s211 = sadd.s32 %s14, 1
      %s212 = smul.u32 %s211, 3
      %p213 = scmp.lt.s32.totalorder %s212, 6
      %s214 = scalar_select %p213, %s212, 6
      %s215 = smul.addr %s214, 2
      %s216 = scalar_lea.vmem %s2, %s215
      %s217 = sadd.s32 %s14, 1
      %s218 = smul.u32 %s217, 3
      %s219 = smul.u32 3, %s14
      %p220 = scmp.lt.s32.totalorder %s219, 5
      %s221 = scalar_select %p220, %s219, 5
      %s222 = smul.addr %s221, 8
      %s223 = scalar_lea.vmem %s3, %s222
      %s224 = smul.u32 3, %s14
      %v226 = vld [vmem:[%s0] sm:$0xf]
      %v227 = vld [vmem:[%s205] sm:$0x3f]
      %v228 = vld [vmem:[%s216] sm:$0x3]
      %v230 = vcombine.high %v227, %v227
      %v232 = vunpack.c.l.s4 1983009808
      %v233 = vunpack.c.0.s8 %v232
      %v234 = vlaneseq
      %v235 = vshrl.u32 %v234, 7
      %v236 = vsub.s32 %v233, %v235
      %v237 = vrot.slane %v227, %v236
      %v239 = vunpack.c.l.s4 1983009808
      %v240 = vunpack.c.0.s8 %v239
      %v241 = vlaneseq
      %v242 = vshrl.u32 %v241, 7
      %v243 = vsub.s32 %v240, %v242
      %v244 = vrot.slane %v230, %v243
      %v245 = vcombine.high %v237, %v237
      %v247 = vunpack.c.l.b16 %v226
      %v248 = vpack.c.b16 %v247, %v247
      %249 = vrot.lane.b32.xlu0 %v248, 124
      %v250 = vpop.permute.xlu0 %249
      %252 = vrot.lane.b32.xlu0 %v237, 127
      %v253 = vpop.permute.xlu0 %252
      %254 = vrot.lane.b32.xlu0 %v245, 127
      %v255 = vpop.permute.xlu0 %254
      %256 = vrot.lane.b32.xlu0 %v244, 127
      %v257 = vpop.permute.xlu0 %256
      %258 = vrot.lane.b32.xlu0 %v228, 127
      %v259 = vpop.permute.xlu0 %258
      %vm260 = vcmask 1039360
      %v261 = vsel %vm260, %v253, %v255
      %v262 = vsel %vm260, %v255, %v257
      %v263 = vsel %vm260, %v257, %v259
      %vm264 = vcmask 31744
      %v266 = vsel %vm264, %v250, 0
      %vm268 = vcmask 1041408
      %v270 = vsel %vm268, %v261, 0
      %v273 = vsel %vm268, %v262, 0
      %v276 = vsel %vm268, %v263, 0
      %278 = vmatprep.subr.bf16.mxu0 %v273
      %279 = vmatpush1.bf16.msra.mxu0 %v270
      %280 = vmatprep.subr.bf16.mxu0 0
      %281 = vmatpush1.bf16.msra.mxu0 0
      %282 = vmatprep.subr.bf16.mxu0 0
      %283 = vmatpush1.bf16.msra.mxu0 0
      %284 = vmatprep.subr.bf16.mxu0 0
      %285 = vmatpush1.bf16.msra.mxu0 0
      %286 = vmatprep.subr.bf16.mxu0 0
      %287 = vmatpush1.bf16.msra.mxu0 0
      %288 = vmatprep.subr.bf16.mxu0 0
      %289 = vmatpush1.bf16.msra.mxu0 0
      %290 = vmatprep.subr.bf16.mxu0 0
      %291 = vmatpush1.bf16.msra.mxu0 0
      %292 = vmatprep.subr.bf16.mxu0 0
      %293 = vmatpush1.bf16.msra.mxu0 0
      %294 = vmatprep.subr.bf16.mxu0 0
      %295 = vmatpush1.bf16.msra.mxu0 0
      %296 = vmatprep.subr.bf16.mxu0 0
      %297 = vmatpush1.bf16.msra.mxu0 0
      %298 = vmatprep.subr.bf16.mxu0 0
      %299 = vmatpush1.bf16.msra.mxu0 0
      %300 = vmatprep.subr.bf16.mxu0 0
      %301 = vmatpush1.bf16.msra.mxu0 0
      %302 = vmatprep.subr.bf16.mxu0 0
      %303 = vmatpush1.bf16.msra.mxu0 0
      %304 = vmatprep.subr.bf16.mxu0 0
      %305 = vmatpush1.bf16.msra.mxu0 0
      %306 = vmatprep.subr.bf16.mxu0 0
      %307 = vmatpush1.bf16.msra.mxu0 0
      %308 = vmatprep.subr.bf16.mxu0 0
      %309 = vmatpush1.bf16.msra.mxu0 0
      %310 = vmatprep.mubr.bf16.mxu0 0
      %311 = vmatmul.mubr.bf16.gmra.mrb[0].mxu0 %v266
      %v312 = vpop.f32.mrb[0].mxu0
      %v313 = vadd.f32 0.0, %v312
      %v314 = vpop.f32.mrb[0].mxu0
      %v315 = vadd.f32 0.0, %v314
      %v316 = vpop.f32.mrb[0].mxu0
      %v317 = vpop.f32.mrb[0].mxu0
      %318 = vdwg.mxu0
      %319 = vmatprep.subr.bf16.mxu0 0
      %320 = vmatpush1.bf16.msra.mxu0 %v276
      %321 = vmatprep.subr.bf16.mxu0 0
      %322 = vmatpush1.bf16.msra.mxu0 0
      %323 = vmatprep.subr.bf16.mxu0 0
      %324 = vmatpush1.bf16.msra.mxu0 0
      %325 = vmatprep.subr.bf16.mxu0 0
      %326 = vmatpush1.bf16.msra.mxu0 0
      %327 = vmatprep.subr.bf16.mxu0 0
      %328 = vmatpush1.bf16.msra.mxu0 0
      %329 = vmatprep.subr.bf16.mxu0 0
      %330 = vmatpush1.bf16.msra.mxu0 0
      %331 = vmatprep.subr.bf16.mxu0 0
      %332 = vmatpush1.bf16.msra.mxu0 0
      %333 = vmatprep.subr.bf16.mxu0 0
      %334 = vmatpush1.bf16.msra.mxu0 0
      %335 = vmatprep.subr.bf16.mxu0 0
      %336 = vmatpush1.bf16.msra.mxu0 0
      %337 = vmatprep.subr.bf16.mxu0 0
      %338 = vmatpush1.bf16.msra.mxu0 0
      %339 = vmatprep.subr.bf16.mxu0 0
      %340 = vmatpush1.bf16.msra.mxu0 0
      %341 = vmatprep.subr.bf16.mxu0 0
      %342 = vmatpush1.bf16.msra.mxu0 0
      %343 = vmatprep.subr.bf16.mxu0 0
      %344 = vmatpush1.bf16.msra.mxu0 0
      %345 = vmatprep.subr.bf16.mxu0 0
      %346 = vmatpush1.bf16.msra.mxu0 0
      %347 = vmatprep.subr.bf16.mxu0 0
      %348 = vmatpush1.bf16.msra.mxu0 0
      %349 = vmatprep.subr.bf16.mxu0 0
      %350 = vmatpush1.bf16.msra.mxu0 0
      %351 = vmatprep.mubr.bf16.mxu0 0
      %352 = vmatmul.mubr.bf16.gmra.mrb[0].mxu0 %v266
      %v353 = vpop.f32.mrb[0].mxu0
      %v354 = vadd.f32 0.0, %v353
      %v355 = vpop.f32.mrb[0].mxu0
      %v356 = vpop.f32.mrb[0].mxu0
      %v357 = vpop.f32.mrb[0].mxu0
      %358 = vdwg.mxu0
      %v360 = vsel %vm264, %v226, 0
      %v363 = vsel %vm268, %v237, 0
      %v366 = vsel %vm268, %v245, 0
      %v369 = vsel %vm268, %v244, 0
      %371 = vmatprep.subr.bf16.mxu0 %v366
      %372 = vmatpush1.bf16.msra.mxu0 %v363
      %373 = vmatprep.subr.bf16.mxu0 0
      %374 = vmatpush1.bf16.msra.mxu0 0
      %375 = vmatprep.subr.bf16.mxu0 0
      %376 = vmatpush1.bf16.msra.mxu0 0
      %377 = vmatprep.subr.bf16.mxu0 0
      %378 = vmatpush1.bf16.msra.mxu0 0
      %379 = vmatprep.subr.bf16.mxu0 0
      %380 = vmatpush1.bf16.msra.mxu0 0
      %381 = vmatprep.subr.bf16.mxu0 0
      %382 = vmatpush1.bf16.msra.mxu0 0
      %383 = vmatprep.subr.bf16.mxu0 0
      %384 = vmatpush1.bf16.msra.mxu0 0
      %385 = vmatprep.subr.bf16.mxu0 0
      %386 = vmatpush1.bf16.msra.mxu0 0
      %387 = vmatprep.subr.bf16.mxu0 0
      %388 = vmatpush1.bf16.msra.mxu0 0
      %389 = vmatprep.subr.bf16.mxu0 0
      %390 = vmatpush1.bf16.msra.mxu0 0
      %391 = vmatprep.subr.bf16.mxu0 0
      %392 = vmatpush1.bf16.msra.mxu0 0
      %393 = vmatprep.subr.bf16.mxu0 0
      %394 = vmatpush1.bf16.msra.mxu0 0
      %395 = vmatprep.subr.bf16.mxu0 0
      %396 = vmatpush1.bf16.msra.mxu0 0
      %397 = vmatprep.subr.bf16.mxu0 0
      %398 = vmatpush1.bf16.msra.mxu0 0
      %399 = vmatprep.subr.bf16.mxu0 0
      %400 = vmatpush1.bf16.msra.mxu0 0
      %401 = vmatprep.subr.bf16.mxu0 0
      %402 = vmatpush1.bf16.msra.mxu0 0
      %403 = vmatprep.mubr.bf16.mxu0 0
      %404 = vmatmul.mubr.bf16.gmra.mrb[0].mxu0 %v360
      %v405 = vpop.f32.mrb[0].mxu0
      %v406 = vadd.f32 %v313, %v405
      %v407 = vpop.f32.mrb[0].mxu0
      %v408 = vadd.f32 %v315, %v407
      %v409 = vpop.f32.mrb[0].mxu0
      %v410 = vpop.f32.mrb[0].mxu0
      %411 = vdwg.mxu0
      %412 = vmatprep.subr.bf16.mxu0 0
      %413 = vmatpush1.bf16.msra.mxu0 %v369
      %414 = vmatprep.subr.bf16.mxu0 0
      %415 = vmatpush1.bf16.msra.mxu0 0
      %416 = vmatprep.subr.bf16.mxu0 0
      %417 = vmatpush1.bf16.msra.mxu0 0
      %418 = vmatprep.subr.bf16.mxu0 0
      %419 = vmatpush1.bf16.msra.mxu0 0
      %420 = vmatprep.subr.bf16.mxu0 0
      %421 = vmatpush1.bf16.msra.mxu0 0
      %422 = vmatprep.subr.bf16.mxu0 0
      %423 = vmatpush1.bf16.msra.mxu0 0
      %424 = vmatprep.subr.bf16.mxu0 0
      %425 = vmatpush1.bf16.msra.mxu0 0
      %426 = vmatprep.subr.bf16.mxu0 0
      %427 = vmatpush1.bf16.msra.mxu0 0
      %428 = vmatprep.subr.bf16.mxu0 0
      %429 = vmatpush1.bf16.msra.mxu0 0
      %430 = vmatprep.subr.bf16.mxu0 0
      %431 = vmatpush1.bf16.msra.mxu0 0
      %432 = vmatprep.subr.bf16.mxu0 0
      %433 = vmatpush1.bf16.msra.mxu0 0
      %434 = vmatprep.subr.bf16.mxu0 0
      %435 = vmatpush1.bf16.msra.mxu0 0
      %436 = vmatprep.subr.bf16.mxu0 0
      %437 = vmatpush1.bf16.msra.mxu0 0
      %438 = vmatprep.subr.bf16.mxu0 0
      %439 = vmatpush1.bf16.msra.mxu0 0
      %440 = vmatprep.subr.bf16.mxu0 0
      %441 = vmatpush1.bf16.msra.mxu0 0
      %442 = vmatprep.subr.bf16.mxu0 0
      %443 = vmatpush1.bf16.msra.mxu0 0
      %444 = vmatprep.mubr.bf16.mxu0 0
      %445 = vmatmul.mubr.bf16.gmra.mrb[0].mxu0 %v360
      %v446 = vpop.f32.mrb[0].mxu0
      %v447 = vadd.f32 %v354, %v446
      %v448 = vpop.f32.mrb[0].mxu0
      %v449 = vpop.f32.mrb[0].mxu0
      %v450 = vpop.f32.mrb[0].mxu0
      %451 = vdwg.mxu0
      %452 = vrot.lane.b32.xlu0 %v248, 120
      %v453 = vpop.permute.xlu0 %452
      %454 = vrot.lane.b32.xlu0 %v237, 126
      %v455 = vpop.permute.xlu0 %454
      %456 = vrot.lane.b32.xlu0 %v245, 126
      %v457 = vpop.permute.xlu0 %456
      %458 = vrot.lane.b32.xlu0 %v244, 126
      %v459 = vpop.permute.xlu0 %458
      %460 = vrot.lane.b32.xlu0 %v228, 126
      %v461 = vpop.permute.xlu0 %460
      %vm462 = vcmask 1031168
      %v463 = vsel %vm462, %v455, %v457
      %v464 = vsel %vm462, %v457, %v459
      %v465 = vsel %vm462, %v459, %v461
      %v467 = vsel %vm264, %v453, 0
      %v470 = vsel %vm268, %v463, 0
      %v473 = vsel %vm268, %v464, 0
      %v476 = vsel %vm268, %v465, 0
      %478 = vmatprep.subr.bf16.mxu0 %v473
      %479 = vmatpush1.bf16.msra.mxu0 %v470
      %480 = vmatprep.subr.bf16.mxu0 0
      %481 = vmatpush1.bf16.msra.mxu0 0
      %482 = vmatprep.subr.bf16.mxu0 0
      %483 = vmatpush1.bf16.msra.mxu0 0
      %484 = vmatprep.subr.bf16.mxu0 0
      %485 = vmatpush1.bf16.msra.mxu0 0
      %486 = vmatprep.subr.bf16.mxu0 0
      %487 = vmatpush1.bf16.msra.mxu0 0
      %488 = vmatprep.subr.bf16.mxu0 0
      %489 = vmatpush1.bf16.msra.mxu0 0
      %490 = vmatprep.subr.bf16.mxu0 0
      %491 = vmatpush1.bf16.msra.mxu0 0
      %492 = vmatprep.subr.bf16.mxu0 0
      %493 = vmatpush1.bf16.msra.mxu0 0
      %494 = vmatprep.subr.bf16.mxu0 0
      %495 = vmatpush1.bf16.msra.mxu0 0
      %496 = vmatprep.subr.bf16.mxu0 0
      %497 = vmatpush1.bf16.msra.mxu0 0
      %498 = vmatprep.subr.bf16.mxu0 0
      %499 = vmatpush1.bf16.msra.mxu0 0
      %500 = vmatprep.subr.bf16.mxu0 0
      %501 = vmatpush1.bf16.msra.mxu0 0
      %502 = vmatprep.subr.bf16.mxu0 0
      %503 = vmatpush1.bf16.msra.mxu0 0
      %504 = vmatprep.subr.bf16.mxu0 0
      %505 = vmatpush1.bf16.msra.mxu0 0
      %506 = vmatprep.subr.bf16.mxu0 0
      %507 = vmatpush1.bf16.msra.mxu0 0
      %508 = vmatprep.subr.bf16.mxu0 0
      %509 = vmatpush1.bf16.msra.mxu0 0
      %510 = vmatprep.mubr.bf16.mxu0 0
      %511 = vmatmul.mubr.bf16.gmra.mrb[0].mxu0 %v467
      %v512 = vpop.f32.mrb[0].mxu0
      %v513 = vadd.f32 0.0, %v512
      %v514 = vpop.f32.mrb[0].mxu0
      %v515 = vadd.f32 0.0, %v514
      %v516 = vpop.f32.mrb[0].mxu0
      %v517 = vpop.f32.mrb[0].mxu0
      %518 = vdwg.mxu0
      %519 = vmatprep.subr.bf16.mxu0 0
      %520 = vmatpush1.bf16.msra.mxu0 %v476
      %521 = vmatprep.subr.bf16.mxu0 0
      %522 = vmatpush1.bf16.msra.mxu0 0
      %523 = vmatprep.subr.bf16.mxu0 0
      %524 = vmatpush1.bf16.msra.mxu0 0
      %525 = vmatprep.subr.bf16.mxu0 0
      %526 = vmatpush1.bf16.msra.mxu0 0
      %527 = vmatprep.subr.bf16.mxu0 0
      %528 = vmatpush1.bf16.msra.mxu0 0
      %529 = vmatprep.subr.bf16.mxu0 0
      %530 = vmatpush1.bf16.msra.mxu0 0
      %531 = vmatprep.subr.bf16.mxu0 0
      %532 = vmatpush1.bf16.msra.mxu0 0
      %533 = vmatprep.subr.bf16.mxu0 0
      %534 = vmatpush1.bf16.msra.mxu0 0
      %535 = vmatprep.subr.bf16.mxu0 0
      %536 = vmatpush1.bf16.msra.mxu0 0
      %537 = vmatprep.subr.bf16.mxu0 0
      %538 = vmatpush1.bf16.msra.mxu0 0
      %539 = vmatprep.subr.bf16.mxu0 0
      %540 = vmatpush1.bf16.msra.mxu0 0
      %541 = vmatprep.subr.bf16.mxu0 0
      %542 = vmatpush1.bf16.msra.mxu0 0
      %543 = vmatprep.subr.bf16.mxu0 0
      %544 = vmatpush1.bf16.msra.mxu0 0
      %545 = vmatprep.subr.bf16.mxu0 0
      %546 = vmatpush1.bf16.msra.mxu0 0
      %547 = vmatprep.subr.bf16.mxu0 0
      %548 = vmatpush1.bf16.msra.mxu0 0
      %549 = vmatprep.subr.bf16.mxu0 0
      %550 = vmatpush1.bf16.msra.mxu0 0
      %551 = vmatprep.mubr.bf16.mxu0 0
      %552 = vmatmul.mubr.bf16.gmra.mrb[0].mxu0 %v467
      %v553 = vpop.f32.mrb[0].mxu0
      %v554 = vadd.f32 0.0, %v553
      %v555 = vpop.f32.mrb[0].mxu0
      %v556 = vpop.f32.mrb[0].mxu0
      %v557 = vpop.f32.mrb[0].mxu0
      %558 = vdwg.mxu0
      %v559 = vadd.f32 %v406, %v513
      %v560 = vadd.f32 %v408, %v515
      %v561 = vadd.f32 %v447, %v554
      %562 = vrot.lane.b32.xlu0 %v248, 116
      %v563 = vpop.permute.xlu0 %562
      %564 = vrot.lane.b32.xlu0 %v237, 110
      %v565 = vpop.permute.xlu0 %564
      %566 = vrot.lane.b32.xlu0 %v245, 110
      %v567 = vpop.permute.xlu0 %566
      %568 = vrot.lane.b32.xlu0 %v244, 110
      %v569 = vpop.permute.xlu0 %568
      %570 = vrot.lane.b32.xlu0 %v228, 110
      %v571 = vpop.permute.xlu0 %570
      %vm572 = vcmask 900096
      %v573 = vsel %vm572, %v565, %v567
      %v574 = vsel %vm572, %v567, %v569
      %v575 = vsel %vm572, %v569, %v571
      %v577 = vsel %vm264, %v563, 0
      %v580 = vsel %vm268, %v573, 0
      %v583 = vsel %vm268, %v574, 0
      %v586 = vsel %vm268, %v575, 0
      %588 = vmatprep.subr.bf16.mxu0 %v583
      %589 = vmatpush1.bf16.msra.mxu0 %v580
      %590 = vmatprep.subr.bf16.mxu0 0
      %591 = vmatpush1.bf16.msra.mxu0 0
      %592 = vmatprep.subr.bf16.mxu0 0
      %593 = vmatpush1.bf16.msra.mxu0 0
      %594 = vmatprep.subr.bf16.mxu0 0
      %595 = vmatpush1.bf16.msra.mxu0 0
      %596 = vmatprep.subr.bf16.mxu0 0
      %597 = vmatpush1.bf16.msra.mxu0 0
      %598 = vmatprep.subr.bf16.mxu0 0
      %599 = vmatpush1.bf16.msra.mxu0 0
      %600 = vmatprep.subr.bf16.mxu0 0
      %601 = vmatpush1.bf16.msra.mxu0 0
      %602 = vmatprep.subr.bf16.mxu0 0
      %603 = vmatpush1.bf16.msra.mxu0 0
      %604 = vmatprep.subr.bf16.mxu0 0
      %605 = vmatpush1.bf16.msra.mxu0 0
      %606 = vmatprep.subr.bf16.mxu0 0
      %607 = vmatpush1.bf16.msra.mxu0 0
      %608 = vmatprep.subr.bf16.mxu0 0
      %609 = vmatpush1.bf16.msra.mxu0 0
      %610 = vmatprep.subr.bf16.mxu0 0
      %611 = vmatpush1.bf16.msra.mxu0 0
      %612 = vmatprep.subr.bf16.mxu0 0
      %613 = vmatpush1.bf16.msra.mxu0 0
      %614 = vmatprep.subr.bf16.mxu0 0
      %615 = vmatpush1.bf16.msra.mxu0 0
      %616 = vmatprep.subr.bf16.mxu0 0
      %617 = vmatpush1.bf16.msra.mxu0 0
      %618 = vmatprep.subr.bf16.mxu0 0
      %619 = vmatpush1.bf16.msra.mxu0 0
      %620 = vmatprep.mubr.bf16.mxu0 0
      %621 = vmatmul.mubr.bf16.gmra.mrb[0].mxu0 %v577
      %v622 = vpop.f32.mrb[0].mxu0
      %v623 = vadd.f32 0.0, %v622
      %v624 = vpop.f32.mrb[0].mxu0
      %v625 = vadd.f32 0.0, %v624
      %v626 = vpop.f32.mrb[0].mxu0
      %v627 = vpop.f32.mrb[0].mxu0
      %628 = vdwg.mxu0
      %629 = vmatprep.subr.bf16.mxu0 0
      %630 = vmatpush1.bf16.msra.mxu0 %v586
      %631 = vmatprep.subr.bf16.mxu0 0
      %632 = vmatpush1.bf16.msra.mxu0 0
      %633 = vmatprep.subr.bf16.mxu0 0
      %634 = vmatpush1.bf16.msra.mxu0 0
      %635 = vmatprep.subr.bf16.mxu0 0
      %636 = vmatpush1.bf16.msra.mxu0 0
      %637 = vmatprep.subr.bf16.mxu0 0
      %638 = vmatpush1.bf16.msra.mxu0 0
      %639 = vmatprep.subr.bf16.mxu0 0
      %640 = vmatpush1.bf16.msra.mxu0 0
      %641 = vmatprep.subr.bf16.mxu0 0
      %642 = vmatpush1.bf16.msra.mxu0 0
      %643 = vmatprep.subr.bf16.mxu0 0
      %644 = vmatpush1.bf16.msra.mxu0 0
      %645 = vmatprep.subr.bf16.mxu0 0
      %646 = vmatpush1.bf16.msra.mxu0 0
      %647 = vmatprep.subr.bf16.mxu0 0
      %648 = vmatpush1.bf16.msra.mxu0 0
      %649 = vmatprep.subr.bf16.mxu0 0
      %650 = vmatpush1.bf16.msra.mxu0 0
      %651 = vmatprep.subr.bf16.mxu0 0
      %652 = vmatpush1.bf16.msra.mxu0 0
      %653 = vmatprep.subr.bf16.mxu0 0
      %654 = vmatpush1.bf16.msra.mxu0 0
      %655 = vmatprep.subr.bf16.mxu0 0
      %656 = vmatpush1.bf16.msra.mxu0 0
      %657 = vmatprep.subr.bf16.mxu0 0
      %658 = vmatpush1.bf16.msra.mxu0 0
      %659 = vmatprep.subr.bf16.mxu0 0
      %660 = vmatpush1.bf16.msra.mxu0 0
      %661 = vmatprep.mubr.bf16.mxu0 0
      %662 = vmatmul.mubr.bf16.gmra.mrb[0].mxu0 %v577
      %v663 = vpop.f32.mrb[0].mxu0
      %v664 = vadd.f32 0.0, %v663
      %v665 = vpop.f32.mrb[0].mxu0
      %v666 = vpop.f32.mrb[0].mxu0
      %v667 = vpop.f32.mrb[0].mxu0
      %668 = vdwg.mxu0
      %v669 = vadd.f32 %v559, %v623
      %v670 = vadd.f32 %v560, %v625
      %v671 = vadd.f32 %v561, %v664
      %672 = vrot.lane.b32.xlu0 %v248, 112
      %v673 = vpop.permute.xlu0 %672
      %674 = vrot.lane.b32.xlu0 %v237, 109
      %v675 = vpop.permute.xlu0 %674
      %676 = vrot.lane.b32.xlu0 %v245, 109
      %v677 = vpop.permute.xlu0 %676
      %678 = vrot.lane.b32.xlu0 %v244, 109
      %v679 = vpop.permute.xlu0 %678
      %680 = vrot.lane.b32.xlu0 %v228, 109
      %v681 = vpop.permute.xlu0 %680
      %vm682 = vcmask 891904
      %v683 = vsel %vm682, %v675, %v677
      %v684 = vsel %vm682, %v677, %v679
      %v685 = vsel %vm682, %v679, %v681
      %v687 = vsel %vm264, %v673, 0
      %v690 = vsel %vm268, %v683, 0
      %v693 = vsel %vm268, %v684, 0
      %v696 = vsel %vm268, %v685, 0
      %698 = vmatprep.subr.bf16.mxu0 %v693
      %699 = vmatpush1.bf16.msra.mxu0 %v690
      %700 = vmatprep.subr.bf16.mxu0 0
      %701 = vmatpush1.bf16.msra.mxu0 0
      %702 = vmatprep.subr.bf16.mxu0 0
      %703 = vmatpush1.bf16.msra.mxu0 0
      %704 = vmatprep.subr.bf16.mxu0 0
      %705 = vmatpush1.bf16.msra.mxu0 0
      %706 = vmatprep.subr.bf16.mxu0 0
      %707 = vmatpush1.bf16.msra.mxu0 0
      %708 = vmatprep.subr.bf16.mxu0 0
      %709 = vmatpush1.bf16.msra.mxu0 0
      %710 = vmatprep.subr.bf16.mxu0 0
      %711 = vmatpush1.bf16.msra.mxu0 0
      %712 = vmatprep.subr.bf16.mxu0 0
      %713 = vmatpush1.bf16.msra.mxu0 0
      %714 = vmatprep.subr.bf16.mxu0 0
      %715 = vmatpush1.bf16.msra.mxu0 0
      %716 = vmatprep.subr.bf16.mxu0 0
      %717 = vmatpush1.bf16.msra.mxu0 0
      %718 = vmatprep.subr.bf16.mxu0 0
      %719 = vmatpush1.bf16.msra.mxu0 0
      %720 = vmatprep.subr.bf16.mxu0 0
      %721 = vmatpush1.bf16.msra.mxu0 0
      %722 = vmatprep.subr.bf16.mxu0 0
      %723 = vmatpush1.bf16.msra.mxu0 0
      %724 = vmatprep.subr.bf16.mxu0 0
      %725 = vmatpush1.bf16.msra.mxu0 0
      %726 = vmatprep.subr.bf16.mxu0 0
      %727 = vmatpush1.bf16.msra.mxu0 0
      %728 = vmatprep.subr.bf16.mxu0 0
      %729 = vmatpush1.bf16.msra.mxu0 0
      %730 = vmatprep.mubr.bf16.mxu0 0
      %731 = vmatmul.mubr.bf16.gmra.mrb[0].mxu0 %v687
      %v732 = vpop.f32.mrb[0].mxu0
      %v733 = vadd.f32 0.0, %v732
      %v734 = vpop.f32.mrb[0].mxu0
      %v735 = vadd.f32 0.0, %v734
      %v736 = vpop.f32.mrb[0].mxu0
      %v737 = vpop.f32.mrb[0].mxu0
      %738 = vdwg.mxu0
      %739 = vmatprep.subr.bf16.mxu0 0
      %740 = vmatpush1.bf16.msra.mxu0 %v696
      %741 = vmatprep.subr.bf16.mxu0 0
      %742 = vmatpush1.bf16.msra.mxu0 0
      %743 = vmatprep.subr.bf16.mxu0 0
      %744 = vmatpush1.bf16.msra.mxu0 0
      %745 = vmatprep.subr.bf16.mxu0 0
      %746 = vmatpush1.bf16.msra.mxu0 0
      %747 = vmatprep.subr.bf16.mxu0 0
      %748 = vmatpush1.bf16.msra.mxu0 0
      %749 = vmatprep.subr.bf16.mxu0 0
      %750 = vmatpush1.bf16.msra.mxu0 0
      %751 = vmatprep.subr.bf16.mxu0 0
      %752 = vmatpush1.bf16.msra.mxu0 0
      %753 = vmatprep.subr.bf16.mxu0 0
      %754 = vmatpush1.bf16.msra.mxu0 0
      %755 = vmatprep.subr.bf16.mxu0 0
      %756 = vmatpush1.bf16.msra.mxu0 0
      %757 = vmatprep.subr.bf16.mxu0 0
      %758 = vmatpush1.bf16.msra.mxu0 0
      %759 = vmatprep.subr.bf16.mxu0 0
      %760 = vmatpush1.bf16.msra.mxu0 0
      %761 = vmatprep.subr.bf16.mxu0 0
      %762 = vmatpush1.bf16.msra.mxu0 0
      %763 = vmatprep.subr.bf16.mxu0 0
      %764 = vmatpush1.bf16.msra.mxu0 0
      %765 = vmatprep.subr.bf16.mxu0 0
      %766 = vmatpush1.bf16.msra.mxu0 0
      %767 = vmatprep.subr.bf16.mxu0 0
      %768 = vmatpush1.bf16.msra.mxu0 0
      %769 = vmatprep.subr.bf16.mxu0 0
      %770 = vmatpush1.bf16.msra.mxu0 0
      %771 = vmatprep.mubr.bf16.mxu0 0
      %772 = vmatmul.mubr.bf16.gmra.mrb[0].mxu0 %v687
      %v773 = vpop.f32.mrb[0].mxu0
      %v774 = vadd.f32 0.0, %v773
      %v775 = vpop.f32.mrb[0].mxu0
      %v776 = vpop.f32.mrb[0].mxu0
      %v777 = vpop.f32.mrb[0].mxu0
      %778 = vdwg.mxu0
      %v779 = vadd.f32 %v669, %v733
      %v780 = vadd.f32 %v670, %v735
      %v781 = vadd.f32 %v671, %v774
      %782 = vrot.lane.b32.xlu0 %v248, 108
      %v783 = vpop.permute.xlu0 %782
      %784 = vrot.lane.b32.xlu0 %v237, 108
      %v785 = vpop.permute.xlu0 %784
      %786 = vrot.lane.b32.xlu0 %v245, 108
      %v787 = vpop.permute.xlu0 %786
      %788 = vrot.lane.b32.xlu0 %v244, 108
      %v789 = vpop.permute.xlu0 %788
      %790 = vrot.lane.b32.xlu0 %v228, 108
      %v791 = vpop.permute.xlu0 %790
      %vm792 = vcmask 883712
      %v793 = vsel %vm792, %v785, %v787
      %v794 = vsel %vm792, %v787, %v789
      %v795 = vsel %vm792, %v789, %v791
      %v797 = vsel %vm264, %v783, 0
      %v800 = vsel %vm268, %v793, 0
      %v803 = vsel %vm268, %v794, 0
      %v806 = vsel %vm268, %v795, 0
      %808 = vmatprep.subr.bf16.mxu0 %v803
      %809 = vmatpush1.bf16.msra.mxu0 %v800
      %810 = vmatprep.subr.bf16.mxu0 0
      %811 = vmatpush1.bf16.msra.mxu0 0
      %812 = vmatprep.subr.bf16.mxu0 0
      %813 = vmatpush1.bf16.msra.mxu0 0
      %814 = vmatprep.subr.bf16.mxu0 0
      %815 = vmatpush1.bf16.msra.mxu0 0
      %816 = vmatprep.subr.bf16.mxu0 0
      %817 = vmatpush1.bf16.msra.mxu0 0
      %818 = vmatprep.subr.bf16.mxu0 0
      %819 = vmatpush1.bf16.msra.mxu0 0
      %820 = vmatprep.subr.bf16.mxu0 0
      %821 = vmatpush1.bf16.msra.mxu0 0
      %822 = vmatprep.subr.bf16.mxu0 0
      %823 = vmatpush1.bf16.msra.mxu0 0
      %824 = vmatprep.subr.bf16.mxu0 0
      %825 = vmatpush1.bf16.msra.mxu0 0
      %826 = vmatprep.subr.bf16.mxu0 0
      %827 = vmatpush1.bf16.msra.mxu0 0
      %828 = vmatprep.subr.bf16.mxu0 0
      %829 = vmatpush1.bf16.msra.mxu0 0
      %830 = vmatprep.subr.bf16.mxu0 0
      %831 = vmatpush1.bf16.msra.mxu0 0
      %832 = vmatprep.subr.bf16.mxu0 0
      %833 = vmatpush1.bf16.msra.mxu0 0
      %834 = vmatprep.subr.bf16.mxu0 0
      %835 = vmatpush1.bf16.msra.mxu0 0
      %836 = vmatprep.subr.bf16.mxu0 0
      %837 = vmatpush1.bf16.msra.mxu0 0
      %838 = vmatprep.subr.bf16.mxu0 0
      %839 = vmatpush1.bf16.msra.mxu0 0
      %840 = vmatprep.mubr.bf16.mxu0 0
      %841 = vmatmul.mubr.bf16.gmra.mrb[0].mxu0 %v797
      %v842 = vpop.f32.mrb[0].mxu0
      %v843 = vadd.f32 0.0, %v842
      %v844 = vpop.f32.mrb[0].mxu0
      %v845 = vadd.f32 0.0, %v844
      %v846 = vpop.f32.mrb[0].mxu0
      %v847 = vpop.f32.mrb[0].mxu0
      %848 = vdwg.mxu0
      %849 = vmatprep.subr.bf16.mxu0 0
      %850 = vmatpush1.bf16.msra.mxu0 %v806
      %851 = vmatprep.subr.bf16.mxu0 0
      %852 = vmatpush1.bf16.msra.mxu0 0
      %853 = vmatprep.subr.bf16.mxu0 0
      %854 = vmatpush1.bf16.msra.mxu0 0
      %855 = vmatprep.subr.bf16.mxu0 0
      %856 = vmatpush1.bf16.msra.mxu0 0
      %857 = vmatprep.subr.bf16.mxu0 0
      %858 = vmatpush1.bf16.msra.mxu0 0
      %859 = vmatprep.subr.bf16.mxu0 0
      %860 = vmatpush1.bf16.msra.mxu0 0
      %861 = vmatprep.subr.bf16.mxu0 0
      %862 = vmatpush1.bf16.msra.mxu0 0
      %863 = vmatprep.subr.bf16.mxu0 0
      %864 = vmatpush1.bf16.msra.mxu0 0
      %865 = vmatprep.subr.bf16.mxu0 0
      %866 = vmatpush1.bf16.msra.mxu0 0
      %867 = vmatprep.subr.bf16.mxu0 0
      %868 = vmatpush1.bf16.msra.mxu0 0
      %869 = vmatprep.subr.bf16.mxu0 0
      %870 = vmatpush1.bf16.msra.mxu0 0
      %871 = vmatprep.subr.bf16.mxu0 0
      %872 = vmatpush1.bf16.msra.mxu0 0
      %873 = vmatprep.subr.bf16.mxu0 0
      %874 = vmatpush1.bf16.msra.mxu0 0
      %875 = vmatprep.subr.bf16.mxu0 0
      %876 = vmatpush1.bf16.msra.mxu0 0
      %877 = vmatprep.subr.bf16.mxu0 0
      %878 = vmatpush1.bf16.msra.mxu0 0
      %879 = vmatprep.subr.bf16.mxu0 0
      %880 = vmatpush1.bf16.msra.mxu0 0
      %881 = vmatprep.mubr.bf16.mxu0 0
      %882 = vmatmul.mubr.bf16.gmra.mrb[0].mxu0 %v797
      %v883 = vpop.f32.mrb[0].mxu0
      %v884 = vadd.f32 0.0, %v883
      %v885 = vpop.f32.mrb[0].mxu0
      %v886 = vpop.f32.mrb[0].mxu0
      %v887 = vpop.f32.mrb[0].mxu0
      %888 = vdwg.mxu0
      %v889 = vadd.f32 %v779, %v843
      %v890 = vadd.f32 %v780, %v845
      %v891 = vadd.f32 %v781, %v884
      %892 = vrot.lane.b32.xlu0 %v248, 104
      %v893 = vpop.permute.xlu0 %892
      %894 = vrot.lane.b32.xlu0 %v237, 92
      %v895 = vpop.permute.xlu0 %894
      %896 = vrot.lane.b32.xlu0 %v245, 92
      %v897 = vpop.permute.xlu0 %896
      %898 = vrot.lane.b32.xlu0 %v244, 92
      %v899 = vpop.permute.xlu0 %898
      %900 = vrot.lane.b32.xlu0 %v228, 92
      %v901 = vpop.permute.xlu0 %900
      %vm902 = vcmask 752640
      %v903 = vsel %vm902, %v895, %v897
      %v904 = vsel %vm902, %v897, %v899
      %v905 = vsel %vm902, %v899, %v901
      %v907 = vsel %vm264, %v893, 0
      %v910 = vsel %vm268, %v903, 0
      %v913 = vsel %vm268, %v904, 0
      %v916 = vsel %vm268, %v905, 0
      %918 = vmatprep.subr.bf16.mxu0 %v913
      %919 = vmatpush1.bf16.msra.mxu0 %v910
      %920 = vmatprep.subr.bf16.mxu0 0
      %921 = vmatpush1.bf16.msra.mxu0 0
      %922 = vmatprep.subr.bf16.mxu0 0
      %923 = vmatpush1.bf16.msra.mxu0 0
      %924 = vmatprep.subr.bf16.mxu0 0
      %925 = vmatpush1.bf16.msra.mxu0 0
      %926 = vmatprep.subr.bf16.mxu0 0
      %927 = vmatpush1.bf16.msra.mxu0 0
      %928 = vmatprep.subr.bf16.mxu0 0
      %929 = vmatpush1.bf16.msra.mxu0 0
      %930 = vmatprep.subr.bf16.mxu0 0
      %931 = vmatpush1.bf16.msra.mxu0 0
      %932 = vmatprep.subr.bf16.mxu0 0
      %933 = vmatpush1.bf16.msra.mxu0 0
      %934 = vmatprep.subr.bf16.mxu0 0
      %935 = vmatpush1.bf16.msra.mxu0 0
      %936 = vmatprep.subr.bf16.mxu0 0
      %937 = vmatpush1.bf16.msra.mxu0 0
      %938 = vmatprep.subr.bf16.mxu0 0
      %939 = vmatpush1.bf16.msra.mxu0 0
      %940 = vmatprep.subr.bf16.mxu0 0
      %941 = vmatpush1.bf16.msra.mxu0 0
      %942 = vmatprep.subr.bf16.mxu0 0
      %943 = vmatpush1.bf16.msra.mxu0 0
      %944 = vmatprep.subr.bf16.mxu0 0
      %945 = vmatpush1.bf16.msra.mxu0 0
      %946 = vmatprep.subr.bf16.mxu0 0
      %947 = vmatpush1.bf16.msra.mxu0 0
      %948 = vmatprep.subr.bf16.mxu0 0
      %949 = vmatpush1.bf16.msra.mxu0 0
      %950 = vmatprep.mubr.bf16.mxu0 0
      %951 = vmatmul.mubr.bf16.gmra.mrb[0].mxu0 %v907
      %v952 = vpop.f32.mrb[0].mxu0
      %v953 = vadd.f32 0.0, %v952
      %v954 = vpop.f32.mrb[0].mxu0
      %v955 = vadd.f32 0.0, %v954
      %v956 = vpop.f32.mrb[0].mxu0
      %v957 = vpop.f32.mrb[0].mxu0
      %958 = vdwg.mxu0
      %959 = vmatprep.subr.bf16.mxu0 0
      %960 = vmatpush1.bf16.msra.mxu0 %v916
      %961 = vmatprep.subr.bf16.mxu0 0
      %962 = vmatpush1.bf16.msra.mxu0 0
      %963 = vmatprep.subr.bf16.mxu0 0
      %964 = vmatpush1.bf16.msra.mxu0 0
      %965 = vmatprep.subr.bf16.mxu0 0
      %966 = vmatpush1.bf16.msra.mxu0 0
      %967 = vmatprep.subr.bf16.mxu0 0
      %968 = vmatpush1.bf16.msra.mxu0 0
      %969 = vmatprep.subr.bf16.mxu0 0
      %970 = vmatpush1.bf16.msra.mxu0 0
      %971 = vmatprep.subr.bf16.mxu0 0
      %972 = vmatpush1.bf16.msra.mxu0 0
      %973 = vmatprep.subr.bf16.mxu0 0
      %974 = vmatpush1.bf16.msra.mxu0 0
      %975 = vmatprep.subr.bf16.mxu0 0
      %976 = vmatpush1.bf16.msra.mxu0 0
      %977 = vmatprep.subr.bf16.mxu0 0
      %978 = vmatpush1.bf16.msra.mxu0 0
      %979 = vmatprep.subr.bf16.mxu0 0
      %980 = vmatpush1.bf16.msra.mxu0 0
      %981 = vmatprep.subr.bf16.mxu0 0
      %982 = vmatpush1.bf16.msra.mxu0 0
      %983 = vmatprep.subr.bf16.mxu0 0
      %984 = vmatpush1.bf16.msra.mxu0 0
      %985 = vmatprep.subr.bf16.mxu0 0
      %986 = vmatpush1.bf16.msra.mxu0 0
      %987 = vmatprep.subr.bf16.mxu0 0
      %988 = vmatpush1.bf16.msra.mxu0 0
      %989 = vmatprep.subr.bf16.mxu0 0
      %990 = vmatpush1.bf16.msra.mxu0 0
      %991 = vmatprep.mubr.bf16.mxu0 0
      %992 = vmatmul.mubr.bf16.gmra.mrb[0].mxu0 %v907
      %v993 = vpop.f32.mrb[0].mxu0
      %v994 = vadd.f32 0.0, %v993
      %v995 = vpop.f32.mrb[0].mxu0
      %v996 = vpop.f32.mrb[0].mxu0
      %v997 = vpop.f32.mrb[0].mxu0
      %998 = vdwg.mxu0
      %v999 = vadd.f32 %v889, %v953
      %v1000 = vadd.f32 %v890, %v955
      %v1001 = vadd.f32 %v891, %v994
      %1002 = vrot.lane.b32.xlu0 %v248, 100
      %v1003 = vpop.permute.xlu0 %1002
      %1004 = vrot.lane.b32.xlu0 %v237, 91
      %v1005 = vpop.permute.xlu0 %1004
      %1006 = vrot.lane.b32.xlu0 %v245, 91
      %v1007 = vpop.permute.xlu0 %1006
      %1008 = vrot.lane.b32.xlu0 %v244, 91
      %v1009 = vpop.permute.xlu0 %1008
      %1010 = vrot.lane.b32.xlu0 %v228, 91
      %v1011 = vpop.permute.xlu0 %1010
      %vm1012 = vcmask 744448
      %v1013 = vsel %vm1012, %v1005, %v1007
      %v1014 = vsel %vm1012, %v1007, %v1009
      %v1015 = vsel %vm1012, %v1009, %v1011
      %v1017 = vsel %vm264, %v1003, 0
      %v1020 = vsel %vm268, %v1013, 0
      %v1023 = vsel %vm268, %v1014, 0
      %v1026 = vsel %vm268, %v1015, 0
      %1028 = vmatprep.subr.bf16.mxu0 %v1023
      %1029 = vmatpush1.bf16.msra.mxu0 %v1020
      %1030 = vmatprep.subr.bf16.mxu0 0
      %1031 = vmatpush1.bf16.msra.mxu0 0
      %1032 = vmatprep.subr.bf16.mxu0 0
      %1033 = vmatpush1.bf16.msra.mxu0 0
      %1034 = vmatprep.subr.bf16.mxu0 0
      %1035 = vmatpush1.bf16.msra.mxu0 0
      %1036 = vmatprep.subr.bf16.mxu0 0
      %1037 = vmatpush1.bf16.msra.mxu0 0
      %1038 = vmatprep.subr.bf16.mxu0 0
      %1039 = vmatpush1.bf16.msra.mxu0 0
      %1040 = vmatprep.subr.bf16.mxu0 0
      %1041 = vmatpush1.bf16.msra.mxu0 0
      %1042 = vmatprep.subr.bf16.mxu0 0
      %1043 = vmatpush1.bf16.msra.mxu0 0
      %1044 = vmatprep.subr.bf16.mxu0 0
      %1045 = vmatpush1.bf16.msra.mxu0 0
      %1046 = vmatprep.subr.bf16.mxu0 0
      %1047 = vmatpush1.bf16.msra.mxu0 0
      %1048 = vmatprep.subr.bf16.mxu0 0
      %1049 = vmatpush1.bf16.msra.mxu0 0
      %1050 = vmatprep.subr.bf16.mxu0 0
      %1051 = vmatpush1.bf16.msra.mxu0 0
      %1052 = vmatprep.subr.bf16.mxu0 0
      %1053 = vmatpush1.bf16.msra.mxu0 0
      %1054 = vmatprep.subr.bf16.mxu0 0
      %1055 = vmatpush1.bf16.msra.mxu0 0
      %1056 = vmatprep.subr.bf16.mxu0 0
      %1057 = vmatpush1.bf16.msra.mxu0 0
      %1058 = vmatprep.subr.bf16.mxu0 0
      %1059 = vmatpush1.bf16.msra.mxu0 0
      %1060 = vmatprep.mubr.bf16.mxu0 0
      %1061 = vmatmul.mubr.bf16.gmra.mrb[0].mxu0 %v1017
      %v1062 = vpop.f32.mrb[0].mxu0
      %v1063 = vadd.f32 0.0, %v1062
      %v1064 = vpop.f32.mrb[0].mxu0
      %v1065 = vadd.f32 0.0, %v1064
      %v1066 = vpop.f32.mrb[0].mxu0
      %v1067 = vpop.f32.mrb[0].mxu0
      %1068 = vdwg.mxu0
      %1069 = vmatprep.subr.bf16.mxu0 0
      %1070 = vmatpush1.bf16.msra.mxu0 %v1026
      %1071 = vmatprep.subr.bf16.mxu0 0
      %1072 = vmatpush1.bf16.msra.mxu0 0
      %1073 = vmatprep.subr.bf16.mxu0 0
      %1074 = vmatpush1.bf16.msra.mxu0 0
      %1075 = vmatprep.subr.bf16.mxu0 0
      %1076 = vmatpush1.bf16.msra.mxu0 0
      %1077 = vmatprep.subr.bf16.mxu0 0
      %1078 = vmatpush1.bf16.msra.mxu0 0
      %1079 = vmatprep.subr.bf16.mxu0 0
      %1080 = vmatpush1.bf16.msra.mxu0 0
      %1081 = vmatprep.subr.bf16.mxu0 0
      %1082 = vmatpush1.bf16.msra.mxu0 0
      %1083 = vmatprep.subr.bf16.mxu0 0
      %1084 = vmatpush1.bf16.msra.mxu0 0
      %1085 = vmatprep.subr.bf16.mxu0 0
      %1086 = vmatpush1.bf16.msra.mxu0 0
      %1087 = vmatprep.subr.bf16.mxu0 0
      %1088 = vmatpush1.bf16.msra.mxu0 0
      %1089 = vmatprep.subr.bf16.mxu0 0
      %1090 = vmatpush1.bf16.msra.mxu0 0
      %1091 = vmatprep.subr.bf16.mxu0 0
      %1092 = vmatpush1.bf16.msra.mxu0 0
      %1093 = vmatprep.subr.bf16.mxu0 0
      %1094 = vmatpush1.bf16.msra.mxu0 0
      %1095 = vmatprep.subr.bf16.mxu0 0
      %1096 = vmatpush1.bf16.msra.mxu0 0
      %1097 = vmatprep.subr.bf16.mxu0 0
      %1098 = vmatpush1.bf16.msra.mxu0 0
      %1099 = vmatprep.subr.bf16.mxu0 0
      %1100 = vmatpush1.bf16.msra.mxu0 0
      %1101 = vmatprep.mubr.bf16.mxu0 0
      %1102 = vmatmul.mubr.bf16.gmra.mrb[0].mxu0 %v1017
      %v1103 = vpop.f32.mrb[0].mxu0
      %v1104 = vadd.f32 0.0, %v1103
      %v1105 = vpop.f32.mrb[0].mxu0
      %v1106 = vpop.f32.mrb[0].mxu0
      %v1107 = vpop.f32.mrb[0].mxu0
      %1108 = vdwg.mxu0
      %v1109 = vadd.f32 %v999, %v1063
      %v1110 = vadd.f32 %v1000, %v1065
      %v1111 = vadd.f32 %v1001, %v1104
      %1112 = vrot.lane.b32.xlu0 %v248, 96
      %v1113 = vpop.permute.xlu0 %1112
      %1114 = vrot.lane.b32.xlu0 %v237, 90
      %v1115 = vpop.permute.xlu0 %1114
      %1116 = vrot.lane.b32.xlu0 %v245, 90
      %v1117 = vpop.permute.xlu0 %1116
      %1118 = vrot.lane.b32.xlu0 %v244, 90
      %v1119 = vpop.permute.xlu0 %1118
      %1120 = vrot.lane.b32.xlu0 %v228, 90
      %v1121 = vpop.permute.xlu0 %1120
      %vm1122 = vcmask 736256
      %v1123 = vsel %vm1122, %v1115, %v1117
      %v1124 = vsel %vm1122, %v1117, %v1119
      %v1125 = vsel %vm1122, %v1119, %v1121
      %v1127 = vsel %vm264, %v1113, 0
      %v1130 = vsel %vm268, %v1123, 0
      %v1133 = vsel %vm268, %v1124, 0
      %v1136 = vsel %vm268, %v1125, 0
      %1138 = vmatprep.subr.bf16.mxu0 %v1133
      %1139 = vmatpush1.bf16.msra.mxu0 %v1130
      %1140 = vmatprep.subr.bf16.mxu0 0
      %1141 = vmatpush1.bf16.msra.mxu0 0
      %1142 = vmatprep.subr.bf16.mxu0 0
      %1143 = vmatpush1.bf16.msra.mxu0 0
      %1144 = vmatprep.subr.bf16.mxu0 0
      %1145 = vmatpush1.bf16.msra.mxu0 0
      %1146 = vmatprep.subr.bf16.mxu0 0
      %1147 = vmatpush1.bf16.msra.mxu0 0
      %1148 = vmatprep.subr.bf16.mxu0 0
      %1149 = vmatpush1.bf16.msra.mxu0 0
      %1150 = vmatprep.subr.bf16.mxu0 0
      %1151 = vmatpush1.bf16.msra.mxu0 0
      %1152 = vmatprep.subr.bf16.mxu0 0
      %1153 = vmatpush1.bf16.msra.mxu0 0
      %1154 = vmatprep.subr.bf16.mxu0 0
      %1155 = vmatpush1.bf16.msra.mxu0 0
      %1156 = vmatprep.subr.bf16.mxu0 0
      %1157 = vmatpush1.bf16.msra.mxu0 0
      %1158 = vmatprep.subr.bf16.mxu0 0
      %1159 = vmatpush1.bf16.msra.mxu0 0
      %1160 = vmatprep.subr.bf16.mxu0 0
      %1161 = vmatpush1.bf16.msra.mxu0 0
      %1162 = vmatprep.subr.bf16.mxu0 0
      %1163 = vmatpush1.bf16.msra.mxu0 0
      %1164 = vmatprep.subr.bf16.mxu0 0
      %1165 = vmatpush1.bf16.msra.mxu0 0
      %1166 = vmatprep.subr.bf16.mxu0 0
      %1167 = vmatpush1.bf16.msra.mxu0 0
      %1168 = vmatprep.subr.bf16.mxu0 0
      %1169 = vmatpush1.bf16.msra.mxu0 0
      %1170 = vmatprep.mubr.bf16.mxu0 0
      %1171 = vmatmul.mubr.bf16.gmra.mrb[0].mxu0 %v1127
      %v1172 = vpop.f32.mrb[0].mxu0
      %v1173 = vadd.f32 0.0, %v1172
      %v1174 = vpop.f32.mrb[0].mxu0
      %v1175 = vadd.f32 0.0, %v1174
      %v1176 = vpop.f32.mrb[0].mxu0
      %v1177 = vpop.f32.mrb[0].mxu0
      %1178 = vdwg.mxu0
      %1179 = vmatprep.subr.bf16.mxu0 0
      %1180 = vmatpush1.bf16.msra.mxu0 %v1136
      %1181 = vmatprep.subr.bf16.mxu0 0
      %1182 = vmatpush1.bf16.msra.mxu0 0
      %1183 = vmatprep.subr.bf16.mxu0 0
      %1184 = vmatpush1.bf16.msra.mxu0 0
      %1185 = vmatprep.subr.bf16.mxu0 0
      %1186 = vmatpush1.bf16.msra.mxu0 0
      %1187 = vmatprep.subr.bf16.mxu0 0
      %1188 = vmatpush1.bf16.msra.mxu0 0
      %1189 = vmatprep.subr.bf16.mxu0 0
      %1190 = vmatpush1.bf16.msra.mxu0 0
      %1191 = vmatprep.subr.bf16.mxu0 0
      %1192 = vmatpush1.bf16.msra.mxu0 0
      %1193 = vmatprep.subr.bf16.mxu0 0
      %1194 = vmatpush1.bf16.msra.mxu0 0
      %1195 = vmatprep.subr.bf16.mxu0 0
      %1196 = vmatpush1.bf16.msra.mxu0 0
      %1197 = vmatprep.subr.bf16.mxu0 0
      %1198 = vmatpush1.bf16.msra.mxu0 0
      %1199 = vmatprep.subr.bf16.mxu0 0
      %1200 = vmatpush1.bf16.msra.mxu0 0
      %1201 = vmatprep.subr.bf16.mxu0 0
      %1202 = vmatpush1.bf16.msra.mxu0 0
      %1203 = vmatprep.subr.bf16.mxu0 0
      %1204 = vmatpush1.bf16.msra.mxu0 0
      %1205 = vmatprep.subr.bf16.mxu0 0
      %1206 = vmatpush1.bf16.msra.mxu0 0
      %1207 = vmatprep.subr.bf16.mxu0 0
      %1208 = vmatpush1.bf16.msra.mxu0 0
      %1209 = vmatprep.subr.bf16.mxu0 0
      %1210 = vmatpush1.bf16.msra.mxu0 0
      %1211 = vmatprep.mubr.bf16.mxu0 0
      %1212 = vmatmul.mubr.bf16.gmra.mrb[0].mxu0 %v1127
      %v1213 = vpop.f32.mrb[0].mxu0
      %v1214 = vadd.f32 0.0, %v1213
      %v1215 = vpop.f32.mrb[0].mxu0
      %v1216 = vpop.f32.mrb[0].mxu0
      %v1217 = vpop.f32.mrb[0].mxu0
      %1218 = vdwg.mxu0
      %v1219 = vadd.f32 %v1109, %v1173
      %v1220 = vadd.f32 %v1110, %v1175
      %v1221 = vadd.f32 %v1111, %v1214
      %v1222 = vunpack.c.l.bf16 %v226
      %1224 = vset.pattern.permute.xlu0 36
      %1225 = vperm.xlu0 %1224, %v1222
      %v1226 = vpop.permute.xlu0 %1225
      %v1228 = vadd.f32 %v1219, %v1226
      %v1229 = vadd.f32 %v1220, %v1226
      %v1230 = vadd.f32 %v1221, %v1226
      %1231 = vst [vmem:[%s223] sm:$0xff] %v1228
      %1232 = vst [vmem:[%s223 + $0x8] sm:$0xff] %v1229
      %1233 = vst [vmem:[%s223 + $0x10] sm:$0xff] %v1230
      %s1234 = smul.u32 3, %s14
      %p1235 = scmp.lt.s32.totalorder %s1234, 5
      %s1236 = scalar_select %p1235, %s1234, 5
      %s1237 = smul.addr %s1236, 8
      %s1238 = scalar_lea.vmem %s3, %s1237
      // Predicated region
      $region33: #{tbasis_conv2d.1} parent=31 // pred_check
        %p1239 = pneg %p109
      $region34: #{tbasis_conv2d.1} parent=31 // pred_check_branch
        %1241 = sbr.rel (%p1239) target = $region36
      $region35: #{tbasis_conv2d.1} parent=31 // pred_region
        %s1242 = smul.u32 3, %s14
      $region36: #{tbasis_conv2d.1} parent=31 // pred_fallthru
        _
    $region32: #{tbasis_conv2d.1} parent=5 // pred_fallthru
      _
    %p1243 = scmp.le.s32.totalorder 2, %s9
    // Predicated region
    $region37: #{tbasis_conv2d.1} parent=5 // pred_check
      %p1244 = pneg %p1243
    $region38: #{tbasis_conv2d.1} parent=5 // pred_check_branch
      %1246 = sbr.rel (%p1244) target = $region40
    $region39: #{tbasis_conv2d.1} parent=5 // pred_region
      %s1247 = ssub.s32 %s9, 2
      // Predicated region
      $region41: #{tbasis_conv2d.1} parent=39 // pred_check
        %p1248 = pneg %p115
      $region42: #{tbasis_conv2d.1} parent=39 // pred_check_branch
        %1250 = sbr.rel (%p1248) target = $region44
      $region43: #{tbasis_conv2d.1} parent=39 // pred_region
        %s1251 = smul.u32 3, %s15
        %p1252 = scmp.lt.s32.totalorder %s1251, 5
        %s1253 = scalar_select %p1252, %s1251, 5
        %s1254 = smul.addr %s1253, 8
        %s1255 = scalar_lea.vmem %s3, %s1254
      $region44: #{tbasis_conv2d.1} parent=39 // pred_fallthru
        _
    $region40: #{tbasis_conv2d.1} parent=5 // pred_fallthru
      _
  $region6: #{tbasis_conv2d.1} parent=0 // loop_footer
    %s13 = sadd.s32 1, %s9
  $region7: #{tbasis_conv2d.1} parent=0 // loop_footer_branch
    %8 = sbr.rel target = $region3
  $region8: #{tbasis_conv2d.1} parent=0 // loop_exit
    _

</llo_original>
